<compile_context>
chip_gen: v7x
topology: tpu7x:2x2x1
jax: 0.10.0
libtpu: 0.0.40
codegen_flags: <defaults>
</compile_context>

<pallas_src>
import functools

import jax
import jax.numpy as jnp
from jax.experimental import pallas as pl
from jax.experimental.pallas import tpu as pltpu

INPUT_SIZE = 10
LAYER_SIZE = 15
OUTPUT_SIZE = 5
NUM_SAMPLES = 20

LANE = 128
# Default batch tile (multiple of 128 lanes).  Per-step VMEM (double-buffered
# in + out + intermediates) ~5-6 MiB — fits every generation's scoped default.
DEFAULT_BLOCK_BATCH = 16384


def _round_up(x, m):
    return ((x + m - 1) // m) * m


def mlp_kernel(xt_ref, w1_ref, b1_ref, w2_ref, b2_ref, ot_ref):
    """Fused 2-layer MLP on one feature-major batch tile.

    xt_ref: (INPUT_SIZE, tb)   activations, batch on the lane axis
    w1_ref: (LAYER_SIZE, INPUT_SIZE)   PyTorch (out, in) layout, VMEM-resident
    b1_ref: (LAYER_SIZE, 1)
    w2_ref: (OUTPUT_SIZE, LAYER_SIZE)
    b2_ref: (OUTPUT_SIZE, 1)
    ot_ref: (OUTPUT_SIZE, tb)  lane-dense output tile
    """
    xt = xt_ref[...]
    h = jnp.dot(w1_ref[...], xt, preferred_element_type=jnp.float32) + b1_ref[...]
    h = jnp.maximum(h, 0.0)                       # ReLU
    y = jnp.dot(w2_ref[...], h, preferred_element_type=jnp.float32) + b2_ref[...]
    ot_ref[...] = y.astype(ot_ref.dtype)


@functools.partial(jax.jit, static_argnames=("block_batch",))
def neural_network_forward(x, w1, b1, w2, b2, *, block_batch=DEFAULT_BLOCK_BATCH):
    """Forward pass of NeuralNetwork for x of shape (n, INPUT_SIZE) -> (n, OUTPUT_SIZE).

    Weights are in the native PyTorch layout: w1 (15, 10), b1 (15, 1),
    w2 (5, 15), b2 (5, 1).
    """
    n = x.shape[0]

    # Layout plumbing (outside the kernel): go feature-major so the batch axis
    # sits on the 128-lane dim.  Pad batch only up to the lane requirement.
    n_pad = _round_up(max(n, 1), LANE)
    xt = jnp.pad(x.T, ((0, 0), (0, n_pad - n)))           # (INPUT_SIZE, n_pad)

    block_batch = max(LANE, _round_up(block_batch, LANE))
    tb = min(block_batch, n_pad)
    grid = (pl.cdiv(n_pad, tb),)

    flops = 2 * n_pad * (INPUT_SIZE * LAYER_SIZE + LAYER_SIZE * OUTPUT_SIZE)
    bytes_accessed = 4 * (
        n_pad * INPUT_SIZE + n_pad * OUTPUT_SIZE
        + LAYER_SIZE * INPUT_SIZE + LAYER_SIZE
        + OUTPUT_SIZE * LAYER_SIZE + OUTPUT_SIZE
    )

    out_t = pl.pallas_call(
        mlp_kernel,
        out_shape=jax.ShapeDtypeStruct((OUTPUT_SIZE, n_pad), jnp.float32),
        grid=grid,
        in_specs=[
            # Activations: tiled along the (lane) batch axis -> pipelined,
            # double-buffered, full-lane contiguous DMA.
            pl.BlockSpec((INPUT_SIZE, tb), lambda i: (0, i)),
            # Weights / biases: same block every step -> VMEM-resident.
            pl.BlockSpec((LAYER_SIZE, INPUT_SIZE), lambda i: (0, 0)),
            pl.BlockSpec((LAYER_SIZE, 1), lambda i: (0, 0)),
            pl.BlockSpec((OUTPUT_SIZE, LAYER_SIZE), lambda i: (0, 0)),
            pl.BlockSpec((OUTPUT_SIZE, 1), lambda i: (0, 0)),
        ],
        # Lane-dense output: unmasked full-lane stores, contiguous write-back.
        out_specs=pl.BlockSpec((OUTPUT_SIZE, tb), lambda i: (0, i)),
        compiler_params=pltpu.CompilerParams(
            # Batch tiles are independent: v7x can shard them across its 2 TCs;
            # harmless on single-TC v5e/v6e.
            dimension_semantics=("parallel",),
            # Headroom above v5e's 16 MiB scoped default; <= v6e/v7x defaults.
            vmem_limit_bytes=32 * 1024 * 1024,
        ),
        cost_estimate=pl.CostEstimate(
            flops=flops, bytes_accessed=bytes_accessed, transcendentals=0),
    )(xt, w1, b1, w2, b2)

    return out_t[:, :n].T                                   # (n, OUTPUT_SIZE)


def init_params(key):
    """Deterministic init mimicking nn.Linear's U(-1/sqrt(fan_in), 1/sqrt(fan_in)).

    Weights are kept in PyTorch's (out_features, in_features) layout; biases as
    (out_features, 1) columns for lane-broadcast inside the kernel.
    """
    k1, k2, k3, k4 = jax.random.split(key, 4)
    bound1 = 1.0 / (INPUT_SIZE ** 0.5)
    bound2 = 1.0 / (LAYER_SIZE ** 0.5)
    w1 = jax.random.uniform(k1, (LAYER_SIZE, INPUT_SIZE), jnp.float32,
                            minval=-bound1, maxval=bound1)
    b1 = jax.random.uniform(k2, (LAYER_SIZE, 1), jnp.float32,
                            minval=-bound1, maxval=bound1)
    w2 = jax.random.uniform(k3, (OUTPUT_SIZE, LAYER_SIZE), jnp.float32,
                            minval=-bound2, maxval=bound2)
    b2 = jax.random.uniform(k4, (OUTPUT_SIZE, 1), jnp.float32,
                            minval=-bound2, maxval=bound2)
    return w1, b1, w2, b2


def _reference(x, w1, b1, w2, b2):
    h = jnp.maximum(x @ w1.T + b1.reshape(1, -1), 0.0)
    return h @ w2.T + b2.reshape(1, -1)


if __name__ == "__main__":
    key = jax.random.PRNGKey(0)
    kx, kp, kx2 = jax.random.split(key, 3)

    w1, b1, w2, b2 = init_params(kp)

    # 1) Spec-sized batch (20 x 10): padded to 128 lanes, single tile, grid=(1,).
    x = jax.random.normal(kx, (NUM_SAMPLES, INPUT_SIZE), jnp.float32)
    out = neural_network_forward(x, w1, b1, w2, b2)
    out = jax.block_until_ready(out)
    ref = _reference(x, w1, b1, w2, b2)
    assert out.shape == (NUM_SAMPLES, OUTPUT_SIZE)
    assert jnp.allclose(out, ref, atol=1e-5, rtol=1e-5)

    # 2) Ragged batch, small tile, evenly dividing grid (300 rows -> 384 lanes,
    #    tb=128, grid=3): exercises the batch grid + resident-weight index_maps.
    n2 = 300
    x2 = jax.random.normal(kx2, (n2, INPUT_SIZE), jnp.float32)
    out2 = neural_network_forward(x2, w1, b1, w2, b2, block_batch=128)
    out2 = jax.block_until_ready(out2)
    ref2 = _reference(x2, w1, b1, w2, b2)
    assert out2.shape == (n2, OUTPUT_SIZE)
    assert jnp.allclose(out2, ref2, atol=1e-5, rtol=1e-5)

    # 3) Non-dividing grid (384 lanes, tb=256, grid=cdiv(384,256)=2): exercises
    #    the clamped edge block instead of padding the batch up to a tile multiple.
    out3 = neural_network_forward(x2, w1, b1, w2, b2, block_batch=256)
    out3 = jax.block_until_ready(out3)
    assert out3.shape == (n2, OUTPUT_SIZE)
    assert jnp.allclose(out3, ref2, atol=1e-5, rtol=1e-5)

    print("KERNEL_OK")
</pallas_src>

<mosaic_0001>
module attributes {stable_mosaic.version = 11 : i64} {
  func.func @mlp_kernel(%arg0: i32, %arg1: memref<10x128xf32, #tpu.memory_space<vmem>>, %arg2: memref<15x10xf32, #tpu.memory_space<vmem>>, %arg3: memref<15x1xf32, #tpu.memory_space<vmem>>, %arg4: memref<5x15xf32, #tpu.memory_space<vmem>>, %arg5: memref<5x1xf32, #tpu.memory_space<vmem>>, %arg6: memref<5x128xf32, #tpu.memory_space<vmem>>) attributes {dimension_semantics = [#tpu.dimension_semantics<parallel>], iteration_bounds = array<i64: 1>, scalar_prefetch = 0 : i64, scratch_operands = 0 : i64, tpu.core_type = #tpu.core_type<tc>, window_params = [{transform_indices = @transform_0, window_bounds = array<i64: 10, 128>}, {pipeline_mode = #tpu.pipeline_mode<synchronous>, transform_indices = @transform_1, window_bounds = array<i64: 15, 10>}, {pipeline_mode = #tpu.pipeline_mode<synchronous>, transform_indices = @transform_2, window_bounds = array<i64: 15, 1>}, {pipeline_mode = #tpu.pipeline_mode<synchronous>, transform_indices = @transform_3, window_bounds = array<i64: 5, 15>}, {pipeline_mode = #tpu.pipeline_mode<synchronous>, transform_indices = @transform_4, window_bounds = array<i64: 5, 1>}, {transform_indices = @transform_5, window_bounds = array<i64: 5, 128>}]} {
    %c0 = arith.constant 0 : index
    %c0_0 = arith.constant 0 : index
    %0 = vector.load %arg1[%c0, %c0_0] : memref<10x128xf32, #tpu.memory_space<vmem>>, vector<10x128xf32>
    %c0_1 = arith.constant 0 : index
    %c0_2 = arith.constant 0 : index
    %1 = vector.load %arg2[%c0_1, %c0_2] : memref<15x10xf32, #tpu.memory_space<vmem>>, vector<15x10xf32>
    %cst = arith.constant dense<0.000000e+00> : vector<15x128xf32>
    %2 = tpu.matmul %1, %0, %cst {dimension_numbers = #tpu.dot_dimension_numbers<[1], [0], [0], [1], [0, 0, 1, 1], [], []>} : vector<15x10xf32>, vector<10x128xf32>, vector<15x128xf32> -> vector<15x128xf32>
    %c0_3 = arith.constant 0 : index
    %c0_4 = arith.constant 0 : index
    %3 = vector.load %arg3[%c0_3, %c0_4] : memref<15x1xf32, #tpu.memory_space<vmem>>, vector<15x1xf32>
    %4 = vector.broadcast %3 : vector<15x1xf32> to vector<15x128xf32>
    %5 = arith.addf %2, %4 : vector<15x128xf32>
    %cst_5 = arith.constant 0.000000e+00 : f32
    %6 = vector.broadcast %cst_5 : f32 to vector<15x128xf32>
    %7 = arith.maximumf %5, %6 : vector<15x128xf32>
    %c0_6 = arith.constant 0 : index
    %c0_7 = arith.constant 0 : index
    %8 = vector.load %arg4[%c0_6, %c0_7] : memref<5x15xf32, #tpu.memory_space<vmem>>, vector<5x15xf32>
    %cst_8 = arith.constant dense<0.000000e+00> : vector<5x128xf32>
    %9 = tpu.matmul %8, %7, %cst_8 {dimension_numbers = #tpu.dot_dimension_numbers<[1], [0], [0], [1], [0, 0, 1, 1], [], []>} : vector<5x15xf32>, vector<15x128xf32>, vector<5x128xf32> -> vector<5x128xf32>
    %c0_9 = arith.constant 0 : index
    %c0_10 = arith.constant 0 : index
    %10 = vector.load %arg5[%c0_9, %c0_10] : memref<5x1xf32, #tpu.memory_space<vmem>>, vector<5x1xf32>
    %11 = vector.broadcast %10 : vector<5x1xf32> to vector<5x128xf32>
    %12 = arith.addf %9, %11 : vector<5x128xf32>
    %c0_11 = arith.constant 0 : index
    %c0_12 = arith.constant 0 : index
    %13 = vector.load %arg6[%c0_11, %c0_12] : memref<5x128xf32, #tpu.memory_space<vmem>>, vector<5x128xf32>
    tpu.vector_store %arg6[%c0_11, %c0_12], %12 {strides = array<i32>} : memref<5x128xf32, #tpu.memory_space<vmem>>, vector<5x128xf32>,
    return
  }
  func.func @transform_0(%arg0: i32) -> (i32, i32) {
    %c0_i32 = arith.constant 0 : i32
    %c0_i32_0 = arith.constant 0 : i32
    return %c0_i32, %arg0 : i32, i32
  }
  func.func @transform_1(%arg0: i32) -> (i32, i32) {
    %c0_i32 = arith.constant 0 : i32
    %c0_i32_0 = arith.constant 0 : i32
    %c0_i32_1 = arith.constant 0 : i32
    return %c0_i32, %c0_i32_0 : i32, i32
  }
  func.func @transform_2(%arg0: i32) -> (i32, i32) {
    %c0_i32 = arith.constant 0 : i32
    %c0_i32_0 = arith.constant 0 : i32
    %c0_i32_1 = arith.constant 0 : i32
    return %c0_i32, %c0_i32_0 : i32, i32
  }
  func.func @transform_3(%arg0: i32) -> (i32, i32) {
    %c0_i32 = arith.constant 0 : i32
    %c0_i32_0 = arith.constant 0 : i32
    %c0_i32_1 = arith.constant 0 : i32
    return %c0_i32, %c0_i32_0 : i32, i32
  }
  func.func @transform_4(%arg0: i32) -> (i32, i32) {
    %c0_i32 = arith.constant 0 : i32
    %c0_i32_0 = arith.constant 0 : i32
    %c0_i32_1 = arith.constant 0 : i32
    return %c0_i32, %c0_i32_0 : i32, i32
  }
  func.func @transform_5(%arg0: i32) -> (i32, i32) {
    %c0_i32 = arith.constant 0 : i32
    %c0_i32_0 = arith.constant 0 : i32
    return %c0_i32, %arg0 : i32, i32
  }
}

</mosaic_0001>

<llo_original>
// kernel: neural_network_forward.1
$region0: #{neural_network_forward.1}
  #allocation0 [shape = 'u32[]', space=smem, size = 0x4, offset = 0x4, fixed_abs, tag = 'smem constant byte address 0x4 - core index']
  #allocation1 [shape = 'u32[144,128]{1,0:T(1,128)}', space=vmem, size = 0x12000, scoped, tag = 'internal scratch']
  %s0 = inlined_call_operand.vmem [shape: f32[10,128], index: 0, kind: input, shape index: {}]
  %s1 = inlined_call_operand.vmem [shape: f32[15,10], index: 1, kind: input, shape index: {}]
  %s2 = inlined_call_operand.vmem [shape: f32[15,1], index: 2, kind: input, shape index: {}]
  %s3 = inlined_call_operand.vmem [shape: f32[5,15], index: 3, kind: input, shape index: {}]
  %s4 = inlined_call_operand.vmem [shape: f32[5,1], index: 4, kind: input, shape index: {}]
  %s5 = inlined_call_operand.vmem [shape: f32[5,128], index: 5, kind: output, shape index: {}]
  %s6 = sld [smem:[#allocation0]]
  $region30: #{neural_network_forward.1} parent=0
    _
  %s8 = ssub.s32 1, %s6
  %s9 = scalar_select 0, %s8, %s6
  // Predicated region
  $region2: #{neural_network_forward.1} parent=0 // pred_check
    _
  $region3: #{neural_network_forward.1} parent=0 // pred_check_branch
    %11 = sbr.rel (0) target = $region5
  $region4: #{neural_network_forward.1} parent=0 // pred_region
    _
  $region5: #{neural_network_forward.1} parent=0 // pred_fallthru
    _
  // Predicated region
  $region6: #{neural_network_forward.1} parent=0 // pred_check
    _
  $region7: #{neural_network_forward.1} parent=0 // pred_check_branch
    %13 = sbr.rel (0) target = $region9
  $region8: #{neural_network_forward.1} parent=0 // pred_region
    _
  $region9: #{neural_network_forward.1} parent=0 // pred_fallthru
    _
  // Predicated region
  $region10: #{neural_network_forward.1} parent=0 // pred_check
    _
  $region11: #{neural_network_forward.1} parent=0 // pred_check_branch
    %15 = sbr.rel (0) target = $region13
  $region12: #{neural_network_forward.1} parent=0 // pred_region
    _
  $region13: #{neural_network_forward.1} parent=0 // pred_fallthru
    _
  // Predicated region
  $region14: #{neural_network_forward.1} parent=0 // pred_check
    _
  $region15: #{neural_network_forward.1} parent=0 // pred_check_branch
    %17 = sbr.rel (0) target = $region17
  $region16: #{neural_network_forward.1} parent=0 // pred_region
    _
  $region17: #{neural_network_forward.1} parent=0 // pred_fallthru
    _
  // Predicated region
  $region18: #{neural_network_forward.1} parent=0 // pred_check
    _
  $region19: #{neural_network_forward.1} parent=0 // pred_check_branch
    %19 = sbr.rel (0) target = $region21
  $region20: #{neural_network_forward.1} parent=0 // pred_region
    _
  $region21: #{neural_network_forward.1} parent=0 // pred_fallthru
    _
  %v20 = vld [vmem:[%s0] sm:$0xff]
  %v21 = vld [vmem:[%s0 + $0x8] sm:$0x3]
  %v22 = vld [vmem:[%s1] sm:$0xff]
  %v23 = vld [vmem:[%s1 + $0x8] sm:$0x7f]
  %v24 = vld [vmem:[%s2] sm:$0xff]
  %v25 = vld [vmem:[%s2 + $0x8] sm:$0x7f]
  %27 = vset.pattern.permute.xlu0 0
  %28 = vperm.xlu0 %27, %v24
  %v29 = vpop.permute.xlu0 %28
  %32 = vset.pattern.permute.xlu0 0
  %33 = vperm.xlu0 %32, %v25
  %v34 = vpop.permute.xlu0 %33
  %vm36 = vcmask 80896
  %v38 = vsel %vm36, %v22, 0
  %v41 = vsel %vm36, %v23, 0
  %vm43 = vcmask 1041408
  %v45 = vsel %vm43, %v21, 0
  %47 = vmatprep.subr.mxu0 0.0
  %48 = vmatpush1.msra.mxu0 %v20
  %49 = vmatprep.subr.mxu0 0.0
  %50 = vmatpush1.msra.mxu0 %v45
  %51 = vmatprep.subr.mxu0 0.0
  %52 = vmatpush1.msra.mxu0 0.0
  %53 = vmatprep.subr.mxu0 0.0
  %54 = vmatpush1.msra.mxu0 0.0
  %55 = vmatprep.subr.mxu0 0.0
  %56 = vmatpush1.msra.mxu0 0.0
  %57 = vmatprep.subr.mxu0 0.0
  %58 = vmatpush1.msra.mxu0 0.0
  %59 = vmatprep.subr.mxu0 0.0
  %60 = vmatpush1.msra.mxu0 0.0
  %61 = vmatprep.subr.mxu0 0.0
  %62 = vmatpush1.msra.mxu0 0.0
  %63 = vmatprep.subr.mxu0 0.0
  %64 = vmatpush1.msra.mxu0 0.0
  %65 = vmatprep.subr.mxu0 0.0
  %66 = vmatpush1.msra.mxu0 0.0
  %67 = vmatprep.subr.mxu0 0.0
  %68 = vmatpush1.msra.mxu0 0.0
  %69 = vmatprep.subr.mxu0 0.0
  %70 = vmatpush1.msra.mxu0 0.0
  %71 = vmatprep.subr.mxu0 0.0
  %72 = vmatpush1.msra.mxu0 0.0
  %73 = vmatprep.subr.mxu0 0.0
  %74 = vmatpush1.msra.mxu0 0.0
  %75 = vmatprep.subr.mxu0 0.0
  %76 = vmatpush1.msra.mxu0 0.0
  %77 = vmatprep.subr.mxu0 0.0
  %78 = vmatpush1.msra.mxu0 0.0
  %79 = vmatprep.subr.mxu0 0.0
  %80 = vmatpush1.msra.mxu0 0.0
  %81 = vmatprep.subr.mxu0 0.0
  %82 = vmatpush1.msra.mxu0 0.0
  %83 = vmatprep.subr.mxu0 0.0
  %84 = vmatpush1.msra.mxu0 0.0
  %85 = vmatprep.subr.mxu0 0.0
  %86 = vmatpush1.msra.mxu0 0.0
  %87 = vmatprep.subr.mxu0 0.0
  %88 = vmatpush1.msra.mxu0 0.0
  %89 = vmatprep.subr.mxu0 0.0
  %90 = vmatpush1.msra.mxu0 0.0
  %91 = vmatprep.subr.mxu0 0.0
  %92 = vmatpush1.msra.mxu0 0.0
  %93 = vmatprep.subr.mxu0 0.0
  %94 = vmatpush1.msra.mxu0 0.0
  %95 = vmatprep.subr.mxu0 0.0
  %96 = vmatpush1.msra.mxu0 0.0
  %97 = vmatprep.subr.mxu0 0.0
  %98 = vmatpush1.msra.mxu0 0.0
  %99 = vmatprep.subr.mxu0 0.0
  %100 = vmatpush1.msra.mxu0 0.0
  %101 = vmatprep.subr.mxu0 0.0
  %102 = vmatpush1.msra.mxu0 0.0
  %103 = vmatprep.subr.mxu0 0.0
  %104 = vmatpush1.msra.mxu0 0.0
  %105 = vmatprep.subr.mxu0 0.0
  %106 = vmatpush1.msra.mxu0 0.0
  %107 = vmatprep.subr.mxu0 0.0
  %108 = vmatpush1.msra.mxu0 0.0
  %109 = vmatprep.subr.mxu0 0.0
  %110 = vmatpush1.msra.mxu0 0.0
  %111 = vmatprep.mubr.f32.mxu0 0.0
  %112 = vmatmul.mubr.f32.gmra.mrb[0].mxu0 %v38
  %v113 = vpop.f32.mrb[0].mxu0
  %v114 = vadd.f32 %v29, %v113
  %v115 = vpop.f32.mrb[0].mxu0
  %116 = vmatprep.mubr.f32.mxu0 0.0
  %117 = vmatmul.mubr.f32.gmra.mrb[0].mxu0 %v41
  %v118 = vpop.f32.mrb[0].mxu0
  %v119 = vadd.f32 %v34, %v118
  %v120 = vpop.f32.mrb[0].mxu0
  %121 = vdwg.mxu0
  %v122 = vmax.f32 %v114, 0.0
  %v123 = vmax.f32 %v119, 0.0
  %v124 = vld [vmem:[%s3] sm:$0x1f]
  %v125 = vld [vmem:[%s4] sm:$0x1f]
  %127 = vset.pattern.permute.xlu0 0
  %128 = vperm.xlu0 %127, %v125
  %v129 = vpop.permute.xlu0 %128
  %vm131 = vcmask 121856
  %v133 = vsel %vm131, %v124, 0
  %vm135 = vcmask 1046528
  %v137 = vsel %vm135, %v123, 0
  %139 = vmatprep.subr.mxu0 0.0
  %140 = vmatpush1.msra.mxu0 %v122
  %141 = vmatprep.subr.mxu0 0.0
  %142 = vmatpush1.msra.mxu0 %v137
  %143 = vmatprep.subr.mxu0 0.0
  %144 = vmatpush1.msra.mxu0 0.0
  %145 = vmatprep.subr.mxu0 0.0
  %146 = vmatpush1.msra.mxu0 0.0
  %147 = vmatprep.subr.mxu0 0.0
  %148 = vmatpush1.msra.mxu0 0.0
  %149 = vmatprep.subr.mxu0 0.0
  %150 = vmatpush1.msra.mxu0 0.0
  %151 = vmatprep.subr.mxu0 0.0
  %152 = vmatpush1.msra.mxu0 0.0
  %153 = vmatprep.subr.mxu0 0.0
  %154 = vmatpush1.msra.mxu0 0.0
  %155 = vmatprep.subr.mxu0 0.0
  %156 = vmatpush1.msra.mxu0 0.0
  %157 = vmatprep.subr.mxu0 0.0
  %158 = vmatpush1.msra.mxu0 0.0
  %159 = vmatprep.subr.mxu0 0.0
  %160 = vmatpush1.msra.mxu0 0.0
  %161 = vmatprep.subr.mxu0 0.0
  %162 = vmatpush1.msra.mxu0 0.0
  %163 = vmatprep.subr.mxu0 0.0
  %164 = vmatpush1.msra.mxu0 0.0
  %165 = vmatprep.subr.mxu0 0.0
  %166 = vmatpush1.msra.mxu0 0.0
  %167 = vmatprep.subr.mxu0 0.0
  %168 = vmatpush1.msra.mxu0 0.0
  %169 = vmatprep.subr.mxu0 0.0
  %170 = vmatpush1.msra.mxu0 0.0
  %171 = vmatprep.subr.mxu0 0.0
  %172 = vmatpush1.msra.mxu0 0.0
  %173 = vmatprep.subr.mxu0 0.0
  %174 = vmatpush1.msra.mxu0 0.0
  %175 = vmatprep.subr.mxu0 0.0
  %176 = vmatpush1.msra.mxu0 0.0
  %177 = vmatprep.subr.mxu0 0.0
  %178 = vmatpush1.msra.mxu0 0.0
  %179 = vmatprep.subr.mxu0 0.0
  %180 = vmatpush1.msra.mxu0 0.0
  %181 = vmatprep.subr.mxu0 0.0
  %182 = vmatpush1.msra.mxu0 0.0
  %183 = vmatprep.subr.mxu0 0.0
  %184 = vmatpush1.msra.mxu0 0.0
  %185 = vmatprep.subr.mxu0 0.0
  %186 = vmatpush1.msra.mxu0 0.0
  %187 = vmatprep.subr.mxu0 0.0
  %188 = vmatpush1.msra.mxu0 0.0
  %189 = vmatprep.subr.mxu0 0.0
  %190 = vmatpush1.msra.mxu0 0.0
  %191 = vmatprep.subr.mxu0 0.0
  %192 = vmatpush1.msra.mxu0 0.0
  %193 = vmatprep.subr.mxu0 0.0
  %194 = vmatpush1.msra.mxu0 0.0
  %195 = vmatprep.subr.mxu0 0.0
  %196 = vmatpush1.msra.mxu0 0.0
  %197 = vmatprep.subr.mxu0 0.0
  %198 = vmatpush1.msra.mxu0 0.0
  %199 = vmatprep.subr.mxu0 0.0
  %200 = vmatpush1.msra.mxu0 0.0
  %201 = vmatprep.subr.mxu0 0.0
  %202 = vmatpush1.msra.mxu0 0.0
  %203 = vmatprep.mubr.f32.mxu0 0.0
  %204 = vmatmul.mubr.f32.gmra.mrb[0].mxu0 %v133
  %v205 = vpop.f32.mrb[0].mxu0
  %v206 = vadd.f32 %v129, %v205
  %v207 = vpop.f32.mrb[0].mxu0
  %208 = vdwg.mxu0
  %209 = vst [vmem:[%s5] sm:$0x1f] %v206
  // Predicated region
  $region22: #{neural_network_forward.1} parent=0 // pred_check
    _
  $region23: #{neural_network_forward.1} parent=0 // pred_check_branch
    %211 = sbr.rel (0) target = $region25
  $region24: #{neural_network_forward.1} parent=0 // pred_region
    _
  $region25: #{neural_network_forward.1} parent=0 // pred_fallthru
    _
  // Predicated region
  $region26: #{neural_network_forward.1} parent=0 // pred_check
    _
  $region27: #{neural_network_forward.1} parent=0 // pred_check_branch
    %213 = sbr.rel (0) target = $region29
  $region28: #{neural_network_forward.1} parent=0 // pred_region
    _
  $region29: #{neural_network_forward.1} parent=0 // pred_fallthru
    _

</llo_original>
